<compile_context>
chip_gen: v7x
topology: tpu7x:2x2x1
jax: 0.10.0
libtpu: 0.0.40
codegen_flags: <defaults>
</compile_context>

<pallas_src>
import functools

import jax
import jax.numpy as jnp
import numpy as np
from jax.experimental import pallas as pl

_LANE = 128  # vreg lane width; every fused block starts at a multiple of this


def _fused_cmt_kernel(t_ref, a_ref, v_ref, w_ref, out_ref):
    """Single-invocation kernel: whole batch resident in VMEM.

    Weight-slab layout (built once by pack_params; all blocks 128-lane aligned):
      rows [0:Dt]        cols [0:H]   wt               cols [128:128+H]  wt@wq/sqrt(H)
      rows [Dt:Dt+Da]    cols [0:H]   wa@wk_a          cols [128:128+H]  wa@wv_a
      rows [Dt+Da:Din]   cols [0:H]   wv@wk_v          cols [128:128+H]  wv@wv_v
      rows [Din:Din+128] cols [0:C]   classifier weight; bias in the last row
    """
    B, S, Dt = t_ref.shape
    Da = a_ref.shape[-1]
    Dv = v_ref.shape[-1]
    Din = Dt + Da + Dv
    L = _LANE
    f32 = jnp.float32

    t2 = t_ref[...].reshape(B * S, Dt)
    a2 = a_ref[...].reshape(B * S, Da)
    v2 = v_ref[...].reshape(B * S, Dv)

    # One fused projection dot per modality; each emits two 128-lane slots so
    # every downstream slice lands exactly on a vreg boundary.
    pt = jnp.dot(t2, w_ref[0:Dt, :], preferred_element_type=f32).reshape(B, S, 2 * L)
    pa = jnp.dot(a2, w_ref[Dt:Dt + Da, :], preferred_element_type=f32).reshape(B, S, 2 * L)
    pv = jnp.dot(v2, w_ref[Dt + Da:Din, :], preferred_element_type=f32).reshape(B, S, 2 * L)

    h_t, q = pt[:, :, 0:L], pt[:, :, L:2 * L]      # text hidden, pre-scaled query
    k_a, v_a = pa[:, :, 0:L], pa[:, :, L:2 * L]    # audio keys / values
    k_v, v_v = pv[:, :, 0:L], pv[:, :, L:2 * L]    # visual keys / values

    # Fuse both cross-attentions: q is shared, so one QK^T against concatenated
    # keys; the single PV matmul then directly yields attn_audio + attn_visual.
    k_cat = jnp.concatenate([k_a, k_v], axis=1)    # (B, 2S, 128)
    v_cat = jnp.concatenate([v_a, v_v], axis=1)    # (B, 2S, 128)

    # TODO(synk): verify with pl.lower_as_mlir whether this contraction emits a
    # k_cat transpose (XLU); negligible at S=8 but worth a pre-transposed key
    # layout at production sequence lengths.
    s = jnp.einsum("bqh,bkh->bqk", q, k_cat, preferred_element_type=f32)  # (B,S,2S)

    # Two independent softmaxes on the audio / visual key halves, computed on
    # the fused score tensor with segment masks (pure VPU, exact divide).
    seg_vis = jax.lax.broadcasted_iota(jnp.int32, (1, 1, 2 * S), 2) >= S
    neg = f32(-1e30)
    m_aud = jnp.max(jnp.where(seg_vis, neg, s), axis=-1, keepdims=True)
    m_vis = jnp.max(jnp.where(seg_vis, s, neg), axis=-1, keepdims=True)
    p = jnp.exp(s - jnp.where(seg_vis, m_vis, m_aud))
    d_aud = jnp.sum(jnp.where(seg_vis, f32(0), p), axis=-1, keepdims=True)
    d_vis = jnp.sum(jnp.where(seg_vis, p, f32(0)), axis=-1, keepdims=True)
    p = p / jnp.where(seg_vis, d_vis, d_aud)

    attn = jnp.einsum("bqk,bkh->bqh", p, v_cat, preferred_element_type=f32)  # (B,S,128)

    fused = h_t + attn                             # residual fusion
    pooled = jnp.mean(fused, axis=1)               # (B, 128)
    # TODO(synk): if real MELD utterances are padded to S, mask both the softmax
    # and this mean-pool with the true sequence lengths.

    # Classifier bias is folded into the last row of the classifier block: lane
    # L-1 of `pooled` is exactly zero (all weights feeding lanes >= H are zero),
    # so setting it to 1.0 picks the bias up in the same matmul.
    bias_lane = (jax.lax.broadcasted_iota(jnp.int32, (1, L), 1) == L - 1).astype(f32)
    logits = jnp.dot(pooled + bias_lane, w_ref[Din:Din + L, 0:L],
                     preferred_element_type=f32)   # (B, 128): logits in lanes [0:C]
    out_ref[...] = logits


def pack_params(params, lane=_LANE):
    """One-time host-side packing: compose/fold all weights into a single slab."""
    wt = np.asarray(params["wt"], np.float64)
    wa = np.asarray(params["wa"], np.float64)
    wv = np.asarray(params["wv"], np.float64)
    Dt, H = wt.shape
    Da, Dv = wa.shape[0], wv.shape[0]
    C = np.asarray(params["wout"]).shape[1]
    Din = Dt + Da + Dv
    assert H < lane and C <= lane
    scale = 1.0 / np.sqrt(np.float64(H))

    slab = np.zeros((Din + lane, 2 * lane), np.float64)
    # text rows: [ h_t | q ]  (softmax scale folded into the q block)
    slab[0:Dt, 0:H] = wt
    slab[0:Dt, lane:lane + H] = wt @ np.asarray(params["wq"], np.float64) * scale
    # audio rows: [ k_a | v_a ]  (modality projection composed with k/v maps)
    slab[Dt:Dt + Da, 0:H] = wa @ np.asarray(params["wk_a"], np.float64)
    slab[Dt:Dt + Da, lane:lane + H] = wa @ np.asarray(params["wv_a"], np.float64)
    # visual rows: [ k_v | v_v ]
    slab[Dt + Da:Din, 0:H] = wv @ np.asarray(params["wk_v"], np.float64)
    slab[Dt + Da:Din, lane:lane + H] = wv @ np.asarray(params["wv_v"], np.float64)
    # classifier block (lane slot 0): weight rows, bias in the last row
    slab[Din:Din + H, 0:C] = np.asarray(params["wout"], np.float64)
    slab[Din + lane - 1, 0:C] = np.asarray(params["bout"], np.float64)[0]
    return jnp.asarray(slab, jnp.float32)


@functools.partial(jax.jit, static_argnames=("num_classes",))
def wrapped_model_forward(text, audio, visual, w_slab, *, num_classes):
    """WrappedModel.forward: returns only the logits (first model output)."""
    B = text.shape[0]
    # Gridless single invocation: whole-array VMEM blocks (well under any VMEM
    # limit), no grid-step overhead, no per-call packing/concatenation.
    # TODO(synk): at production batch sizes add a leading 'parallel' grid axis
    # over dialogs (v7x has 2 TensorCores) and consider bf16 operands on v6e/v7x.
    out = pl.pallas_call(
        _fused_cmt_kernel,
        out_shape=jax.ShapeDtypeStruct((B, _LANE), jnp.float32),
    )(text, audio, visual, w_slab)
    return out[:, :num_classes]


def reference_forward(text, audio, visual, params):
    """Plain-JAX reference of the same synthetic model (accurate f32)."""
    hi = jax.lax.Precision.HIGHEST
    h_t = jnp.einsum("bsd,dh->bsh", text, params["wt"], precision=hi)
    h_a = jnp.einsum("bsd,dh->bsh", audio, params["wa"], precision=hi)
    h_v = jnp.einsum("bsd,dh->bsh", visual, params["wv"], precision=hi)
    H = h_t.shape[-1]
    q = jnp.einsum("bsh,hk->bsk", h_t, params["wq"], precision=hi)

    def attend(h_src, wk, wv):
        k = jnp.einsum("bsh,hk->bsk", h_src, wk, precision=hi)
        val = jnp.einsum("bsh,hk->bsk", h_src, wv, precision=hi)
        s = jnp.einsum("bqh,bkh->bqk", q, k, precision=hi) / jnp.sqrt(jnp.float32(H))
        p = jax.nn.softmax(s, axis=-1)
        return jnp.einsum("bqk,bkh->bqh", p, val, precision=hi)

    fused = h_t + attend(h_a, params["wk_a"], params["wv_a"]) \
                + attend(h_v, params["wk_v"], params["wv_v"])
    pooled = jnp.mean(fused, axis=1)
    return jnp.einsum("bh,hc->bc", pooled, params["wout"], precision=hi) + params["bout"][0]


def init_params(key, Dt, Da, Dv, H, C):
    keys = jax.random.split(key, 10)
    mk = lambda k, shp: (jax.random.normal(k, shp, jnp.float32)
                         / jnp.sqrt(jnp.float32(shp[0])))
    return {
        "wt": mk(keys[0], (Dt, H)),
        "wa": mk(keys[1], (Da, H)),
        "wv": mk(keys[2], (Dv, H)),
        "wq": mk(keys[3], (H, H)),
        "wk_a": mk(keys[4], (H, H)),
        "wv_a": mk(keys[5], (H, H)),
        "wk_v": mk(keys[6], (H, H)),
        "wv_v": mk(keys[7], (H, H)),
        "wout": mk(keys[8], (H, C)),
        "bout": 0.01 * jax.random.normal(keys[9], (1, C), jnp.float32),
    }


if __name__ == "__main__":
    B, S = 2, 8               # batch (dialog utterances), sequence length
    Dt, Da, Dv = 32, 16, 16   # text / audio / visual feature dims
    H, C = 32, 7              # hidden size, 7 MELD emotion classes

    key = jax.random.PRNGKey(0)
    k_t, k_a, k_v, k_p = jax.random.split(key, 4)
    text = jax.random.normal(k_t, (B, S, Dt), jnp.float32)
    audio = jax.random.normal(k_a, (B, S, Da), jnp.float32)
    visual = jax.random.normal(k_v, (B, S, Dv), jnp.float32)
    params = init_params(k_p, Dt, Da, Dv, H, C)

    # One-time weight packing, hoisted out of the forward path.
    w_slab = pack_params(params)

    out = wrapped_model_forward(text, audio, visual, w_slab, num_classes=C)
    out = jax.block_until_ready(out)

    ref = reference_forward(text, audio, visual, params)
    # exact softmax divide + f32 MXU math -> tight tolerance (reassociation only)
    np.testing.assert_allclose(np.asarray(out), np.asarray(ref),
                               rtol=2e-4, atol=2e-4)

    print("KERNEL_OK")
</pallas_src>

<mosaic_0001>
module attributes {stable_mosaic.version = 11 : i64} {
  func.func @_fused_cmt_kernel(%arg0: memref<2x8x32xf32, #tpu.memory_space<vmem>>, %arg1: memref<2x8x16xf32, #tpu.memory_space<vmem>>, %arg2: memref<2x8x16xf32, #tpu.memory_space<vmem>>, %arg3: memref<192x256xf32, #tpu.memory_space<vmem>>, %arg4: memref<2x128xf32, #tpu.memory_space<vmem>>) attributes {dimension_semantics = [], scalar_prefetch = 0 : i64, scratch_operands = 0 : i64, tpu.core_type = #tpu.core_type<tc>} {
    %c0 = arith.constant 0 : index
    %c0_0 = arith.constant 0 : index
    %c0_1 = arith.constant 0 : index
    %0 = vector.load %arg0[%c0, %c0_0, %c0_1] : memref<2x8x32xf32, #tpu.memory_space<vmem>>, vector<2x8x32xf32>
    %1 = vector.shape_cast %0 : vector<2x8x32xf32> to vector<16x32xf32>
    %c0_2 = arith.constant 0 : index
    %c0_3 = arith.constant 0 : index
    %c0_4 = arith.constant 0 : index
    %2 = vector.load %arg1[%c0_2, %c0_3, %c0_4] : memref<2x8x16xf32, #tpu.memory_space<vmem>>, vector<2x8x16xf32>
    %3 = vector.shape_cast %2 : vector<2x8x16xf32> to vector<16x16xf32>
    %c0_5 = arith.constant 0 : index
    %c0_6 = arith.constant 0 : index
    %c0_7 = arith.constant 0 : index
    %4 = vector.load %arg2[%c0_5, %c0_6, %c0_7] : memref<2x8x16xf32, #tpu.memory_space<vmem>>, vector<2x8x16xf32>
    %5 = vector.shape_cast %4 : vector<2x8x16xf32> to vector<16x16xf32>
    %c0_8 = arith.constant 0 : index
    %c0_9 = arith.constant 0 : index
    %6 = vector.load %arg3[%c0_8, %c0_9] : memref<192x256xf32, #tpu.memory_space<vmem>>, vector<32x256xf32>
    %cst = arith.constant dense<0.000000e+00> : vector<16x256xf32>
    %7 = tpu.matmul %1, %6, %cst {dimension_numbers = #tpu.dot_dimension_numbers<[1], [0], [0], [1], [0, 0, 1, 1], [], []>} : vector<16x32xf32>, vector<32x256xf32>, vector<16x256xf32> -> vector<16x256xf32>
    %8 = vector.shape_cast %7 : vector<16x256xf32> to vector<2x8x256xf32>
    %c32 = arith.constant 32 : index
    %c0_10 = arith.constant 0 : index
    %9 = vector.load %arg3[%c32, %c0_10] : memref<192x256xf32, #tpu.memory_space<vmem>>, vector<16x256xf32>
    %cst_11 = arith.constant dense<0.000000e+00> : vector<16x256xf32>
    %10 = tpu.matmul %3, %9, %cst_11 {dimension_numbers = #tpu.dot_dimension_numbers<[1], [0], [0], [1], [0, 0, 1, 1], [], []>} : vector<16x16xf32>, vector<16x256xf32>, vector<16x256xf32> -> vector<16x256xf32>
    %11 = vector.shape_cast %10 : vector<16x256xf32> to vector<2x8x256xf32>
    %c48 = arith.constant 48 : index
    %c0_12 = arith.constant 0 : index
    %12 = vector.load %arg3[%c48, %c0_12] : memref<192x256xf32, #tpu.memory_space<vmem>>, vector<16x256xf32>
    %cst_13 = arith.constant dense<0.000000e+00> : vector<16x256xf32>
    %13 = tpu.matmul %5, %12, %cst_13 {dimension_numbers = #tpu.dot_dimension_numbers<[1], [0], [0], [1], [0, 0, 1, 1], [], []>} : vector<16x16xf32>, vector<16x256xf32>, vector<16x256xf32> -> vector<16x256xf32>
    %14 = vector.shape_cast %13 : vector<16x256xf32> to vector<2x8x256xf32>
    %15 = vector.extract_strided_slice %8 {offsets = [0, 0, 0], sizes = [2, 8, 128], strides = [1, 1, 1]} : vector<2x8x256xf32> to vector<2x8x128xf32>
    %16 = vector.extract_strided_slice %8 {offsets = [0, 0, 128], sizes = [2, 8, 128], strides = [1, 1, 1]} : vector<2x8x256xf32> to vector<2x8x128xf32>
    %17 = vector.extract_strided_slice %11 {offsets = [0, 0, 0], sizes = [2, 8, 128], strides = [1, 1, 1]} : vector<2x8x256xf32> to vector<2x8x128xf32>
    %18 = vector.extract_strided_slice %11 {offsets = [0, 0, 128], sizes = [2, 8, 128], strides = [1, 1, 1]} : vector<2x8x256xf32> to vector<2x8x128xf32>
    %19 = vector.extract_strided_slice %14 {offsets = [0, 0, 0], sizes = [2, 8, 128], strides = [1, 1, 1]} : vector<2x8x256xf32> to vector<2x8x128xf32>
    %20 = vector.extract_strided_slice %14 {offsets = [0, 0, 128], sizes = [2, 8, 128], strides = [1, 1, 1]} : vector<2x8x256xf32> to vector<2x8x128xf32>
    %21 = tpu.concatenate %17, %19 in 1 : vector<2x8x128xf32>, vector<2x8x128xf32> -> vector<2x16x128xf32>
    %22 = tpu.concatenate %18, %20 in 1 : vector<2x8x128xf32>, vector<2x8x128xf32> -> vector<2x16x128xf32>
    "tpu.trace_start"() <{level = 10 : i32, message = "bqh,bkh->bqk"}> : () -> ()
    %cst_14 = arith.constant dense<0.000000e+00> : vector<2x8x16xf32>
    %23 = tpu.matmul %16, %21, %cst_14 {dimension_numbers = #tpu.dot_dimension_numbers<[2], [2], [1], [1], [0, 0, 0, 1, 1, 1], [0], [0]>} : vector<2x8x128xf32>, vector<2x16x128xf32>, vector<2x8x16xf32> -> vector<2x8x16xf32>
    "tpu.trace_stop"() : () -> ()
    %24 = tpu.iota {dimensions = array<i32: 2>} : vector<1x1x16xi32>
    %c8_i32 = arith.constant 8 : i32
    %25 = vector.broadcast %c8_i32 : i32 to vector<1x1x16xi32>
    %26 = arith.cmpi sge, %24, %25 : vector<1x1x16xi32>
    %cst_15 = arith.constant -1.000000e+30 : f32
    %27 = vector.shape_cast %26 : vector<1x1x16xi1> to vector<1x1x16xi1>
    %28 = vector.broadcast %27 : vector<1x1x16xi1> to vector<2x8x16xi1>
    %29 = vector.broadcast %cst_15 : f32 to vector<2x8x16xf32>
    %30 = arith.select %28, %29, %23 : vector<2x8x16xi1>, vector<2x8x16xf32>
    %cst_16 = arith.constant dense<0xFF800000> : vector<2x8xf32>
    %31 = vector.multi_reduction <maximumf>, %30, %cst_16 [2] : vector<2x8x16xf32> to vector<2x8xf32>
    %32 = vector.shape_cast %31 : vector<2x8xf32> to vector<2x8x1xf32>
    %cst_17 = arith.constant -1.000000e+30 : f32
    %33 = vector.shape_cast %26 : vector<1x1x16xi1> to vector<1x1x16xi1>
    %34 = vector.broadcast %33 : vector<1x1x16xi1> to vector<2x8x16xi1>
    %35 = vector.broadcast %cst_17 : f32 to vector<2x8x16xf32>
    %36 = arith.select %34, %23, %35 : vector<2x8x16xi1>, vector<2x8x16xf32>
    %cst_18 = arith.constant dense<0xFF800000> : vector<2x8xf32>
    %37 = vector.multi_reduction <maximumf>, %36, %cst_18 [2] : vector<2x8x16xf32> to vector<2x8xf32>
    %38 = vector.shape_cast %37 : vector<2x8xf32> to vector<2x8x1xf32>
    %39 = vector.shape_cast %26 : vector<1x1x16xi1> to vector<1x1x16xi1>
    %40 = vector.broadcast %39 : vector<1x1x16xi1> to vector<2x8x16xi1>
    %41 = vector.shape_cast %38 : vector<2x8x1xf32> to vector<2x8x1xf32>
    %42 = vector.broadcast %41 : vector<2x8x1xf32> to vector<2x8x16xf32>
    %43 = vector.shape_cast %32 : vector<2x8x1xf32> to vector<2x8x1xf32>
    %44 = vector.broadcast %43 : vector<2x8x1xf32> to vector<2x8x16xf32>
    %45 = arith.select %40, %42, %44 : vector<2x8x16xi1>, vector<2x8x16xf32>
    %46 = arith.subf %23, %45 : vector<2x8x16xf32>
    %47 = math.exp %46 : vector<2x8x16xf32>
    %cst_19 = arith.constant 0.000000e+00 : f32
    %48 = vector.shape_cast %26 : vector<1x1x16xi1> to vector<1x1x16xi1>
    %49 = vector.broadcast %48 : vector<1x1x16xi1> to vector<2x8x16xi1>
    %50 = vector.broadcast %cst_19 : f32 to vector<2x8x16xf32>
    %51 = arith.select %49, %50, %47 : vector<2x8x16xi1>, vector<2x8x16xf32>
    %cst_20 = arith.constant dense<0.000000e+00> : vector<2x8xf32>
    %52 = vector.multi_reduction <add>, %51, %cst_20 [2] : vector<2x8x16xf32> to vector<2x8xf32>
    %53 = vector.shape_cast %52 : vector<2x8xf32> to vector<2x8x1xf32>
    %cst_21 = arith.constant 0.000000e+00 : f32
    %54 = vector.shape_cast %26 : vector<1x1x16xi1> to vector<1x1x16xi1>
    %55 = vector.broadcast %54 : vector<1x1x16xi1> to vector<2x8x16xi1>
    %56 = vector.broadcast %cst_21 : f32 to vector<2x8x16xf32>
    %57 = arith.select %55, %47, %56 : vector<2x8x16xi1>, vector<2x8x16xf32>
    %cst_22 = arith.constant dense<0.000000e+00> : vector<2x8xf32>
    %58 = vector.multi_reduction <add>, %57, %cst_22 [2] : vector<2x8x16xf32> to vector<2x8xf32>
    %59 = vector.shape_cast %58 : vector<2x8xf32> to vector<2x8x1xf32>
    %60 = vector.shape_cast %26 : vector<1x1x16xi1> to vector<1x1x16xi1>
    %61 = vector.broadcast %60 : vector<1x1x16xi1> to vector<2x8x16xi1>
    %62 = vector.shape_cast %59 : vector<2x8x1xf32> to vector<2x8x1xf32>
    %63 = vector.broadcast %62 : vector<2x8x1xf32> to vector<2x8x16xf32>
    %64 = vector.shape_cast %53 : vector<2x8x1xf32> to vector<2x8x1xf32>
    %65 = vector.broadcast %64 : vector<2x8x1xf32> to vector<2x8x16xf32>
    %66 = arith.select %61, %63, %65 : vector<2x8x16xi1>, vector<2x8x16xf32>
    %67 = arith.divf %47, %66 : vector<2x8x16xf32>
    "tpu.trace_start"() <{level = 10 : i32, message = "bqk,bkh->bqh"}> : () -> ()
    %cst_23 = arith.constant dense<0.000000e+00> : vector<2x8x128xf32>
    %68 = tpu.matmul %67, %22, %cst_23 {dimension_numbers = #tpu.dot_dimension_numbers<[2], [1], [1], [2], [0, 0, 0, 1, 1, 2], [0], [0]>} : vector<2x8x16xf32>, vector<2x16x128xf32>, vector<2x8x128xf32> -> vector<2x8x128xf32>
    "tpu.trace_stop"() : () -> ()
    %69 = arith.addf %15, %68 : vector<2x8x128xf32>
    %cst_24 = arith.constant dense<0.000000e+00> : vector<2x128xf32>
    %70 = vector.multi_reduction <add>, %69, %cst_24 [1] : vector<2x8x128xf32> to vector<2x128xf32>
    %cst_25 = arith.constant 8.000000e+00 : f32
    %71 = vector.broadcast %cst_25 : f32 to vector<2x128xf32>
    %72 = arith.divf %70, %71 : vector<2x128xf32>
    %73 = tpu.iota {dimensions = array<i32: 1>} : vector<1x128xi32>
    %c127_i32 = arith.constant 127 : i32
    %74 = vector.broadcast %c127_i32 : i32 to vector<1x128xi32>
    %75 = arith.cmpi eq, %73, %74 : vector<1x128xi32>
    %76 = arith.extui %75 : vector<1x128xi1> to vector<1x128xi32>
    %77 = arith.sitofp %76 : vector<1x128xi32> to vector<1x128xf32>
    %78 = vector.broadcast %77 : vector<1x128xf32> to vector<2x128xf32>
    %79 = arith.addf %72, %78 : vector<2x128xf32>
    %c64 = arith.constant 64 : index
    %c0_26 = arith.constant 0 : index
    %80 = vector.load %arg3[%c64, %c0_26] : memref<192x256xf32, #tpu.memory_space<vmem>>, vector<128x128xf32>
    %cst_27 = arith.constant dense<0.000000e+00> : vector<2x128xf32>
    %81 = tpu.matmul %79, %80, %cst_27 {dimension_numbers = #tpu.dot_dimension_numbers<[1], [0], [0], [1], [0, 0, 1, 1], [], []>} : vector<2x128xf32>, vector<128x128xf32>, vector<2x128xf32> -> vector<2x128xf32>
    %c0_28 = arith.constant 0 : index
    %c0_29 = arith.constant 0 : index
    %82 = vector.load %arg4[%c0_28, %c0_29] : memref<2x128xf32, #tpu.memory_space<vmem>>, vector<2x128xf32>
    tpu.vector_store %arg4[%c0_28, %c0_29], %81 {strides = array<i32>} : memref<2x128xf32, #tpu.memory_space<vmem>>, vector<2x128xf32>,
    return
  }
}

</mosaic_0001>

<llo_original>
// kernel: wrapped_model_forward.1
$region0: #{wrapped_model_forward.1}
  #allocation0 [shape = 'u32[]', space=smem, size = 0x4, offset = 0x4, fixed_abs, tag = 'smem constant byte address 0x4 - core index']
  #allocation1 [shape = 'u32[144,128]{1,0:T(1,128)}', space=vmem, size = 0x12000, scoped, tag = 'internal scratch']
  %s0 = inlined_call_operand.hbm [shape: f32[2,8,32], index: 0, kind: input, shape index: {}]
  %s1 = inlined_call_operand.hbm [shape: f32[2,8,16], index: 1, kind: input, shape index: {}]
  %s2 = inlined_call_operand.hbm [shape: f32[2,8,16], index: 2, kind: input, shape index: {}]
  %s3 = inlined_call_operand.hbm [shape: f32[192,256], index: 3, kind: input, shape index: {}]
  %s4 = inlined_call_operand.hbm [shape: f32[2,128], index: 4, kind: output, shape index: {}]
  %s5 = sld [smem:[#allocation0]]
  $region42: #{wrapped_model_forward.1} parent=0
    _
  %s7 = ssub.s32 1, %s5
  %s8 = scalar_select 0, %s7, %s5
  $region1: #{wrapped_model_forward.1} parent=0
    #allocation2 [shape = 'u8[8192]{0}', space=vmem, size = 0x2000, scoped, tag = 'input window, operand 0, single buffered']
    #allocation3 [shape = 's32[1]{0}', space=sflag, size = 0x4, scoped, tag = 'scoped memory for wrapped_model_forward.1']
    #allocation4 [shape = 's32[1]{0}', space=sflag, size = 0x4, scoped, tag = 'scoped memory for wrapped_model_forward.1']
    #allocation5 [shape = 'u8[8192]{0}', space=vmem, size = 0x2000, scoped, tag = 'input window, operand 1, single buffered']
    #allocation6 [shape = 's32[1]{0}', space=sflag, size = 0x4, scoped, tag = 'scoped memory for wrapped_model_forward.1']
    #allocation7 [shape = 'u8[8192]{0}', space=vmem, size = 0x2000, scoped, tag = 'input window, operand 2, single buffered']
    #allocation8 [shape = 'u8[196608]{0}', space=vmem, size = 0x30000, scoped, tag = 'input window, operand 3, single buffered']
    #allocation9 [shape = 's32[1]{0}', space=sflag, size = 0x4, scoped, tag = 'scoped memory for wrapped_model_forward.1']
    #allocation10 [shape = 'u8[1024]{0}', space=vmem, size = 0x400, scoped, tag = 'output window, operand 0, single buffered']
    %9 = vsyncpa [#allocation3], 0
    %10 = vsyncpa [#allocation6], 0
    %11 = vsyncpa [#allocation9], 0
    %12 = vsyncpa [#allocation4], 0
    // Predicated region
    $region2: #{wrapped_model_forward.1} parent=1 // pred_check
      _
    $region3: #{wrapped_model_forward.1} parent=1 // pred_check_branch
      %14 = sbr.rel (0) target = $region5
    $region4: #{wrapped_model_forward.1} parent=1 // pred_region
      %s16 = ssub.s32 256, 256
      %17 = vsyncadd [#allocation3], %s16
      %s18 = sshll.u32 [#allocation2], 4
      %s19 = int_to_ptr.vmem [resolvable:$true] %s18
      %24 = dma.hbm_to_vmem [thread:$0]  %s0, 256, %s19, [#allocation3], 128, 128, 8
    $region5: #{wrapped_model_forward.1} parent=1 // pred_fallthru
      _
    // Predicated region
    $region6: #{wrapped_model_forward.1} parent=1 // pred_check
      _
    $region7: #{wrapped_model_forward.1} parent=1 // pred_check_branch
      %26 = sbr.rel (0) target = $region9
    $region8: #{wrapped_model_forward.1} parent=1 // pred_region
      %s28 = ssub.s32 256, 256
      %29 = vsyncadd [#allocation6], %s28
      %s30 = sshll.u32 [#allocation5], 4
      %s31 = int_to_ptr.vmem [resolvable:$true] %s30
      %36 = dma.hbm_to_vmem [thread:$0]  %s1, 256, %s31, [#allocation6], 128, 128, 8
    $region9: #{wrapped_model_forward.1} parent=1 // pred_fallthru
      _
    // Predicated region
    $region10: #{wrapped_model_forward.1} parent=1 // pred_check
      _
    $region11: #{wrapped_model_forward.1} parent=1 // pred_check_branch
      %38 = sbr.rel (0) target = $region13
    $region12: #{wrapped_model_forward.1} parent=1 // pred_region
      %s40 = ssub.s32 256, 256
      %41 = vsyncadd [#allocation6], %s40
      %s42 = sshll.u32 [#allocation7], 4
      %s43 = int_to_ptr.vmem [resolvable:$true] %s42
      %48 = dma.hbm_to_vmem [thread:$0]  %s2, 256, %s43, [#allocation6], 128, 128, 8
    $region13: #{wrapped_model_forward.1} parent=1 // pred_fallthru
      _
    // Predicated region
    $region14: #{wrapped_model_forward.1} parent=1 // pred_check
      _
    $region15: #{wrapped_model_forward.1} parent=1 // pred_check_branch
      %50 = sbr.rel (0) target = $region17
    $region16: #{wrapped_model_forward.1} parent=1 // pred_region
      %s52 = ssub.s32 6144, 6144
      %53 = vsyncadd [#allocation9], %s52
      %s54 = sshll.u32 [#allocation8], 4
      %s55 = int_to_ptr.vmem [resolvable:$true] %s54
      %60 = dma.hbm_to_vmem [thread:$0]  %s3, 6144, %s55, [#allocation9], 256, 256, 16
    $region17: #{wrapped_model_forward.1} parent=1 // pred_fallthru
      _
    // Predicated region
    $region18: #{wrapped_model_forward.1} parent=1 // pred_check
      _
    $region19: #{wrapped_model_forward.1} parent=1 // pred_check_branch
      %62 = sbr.rel (0) target = $region21
    $region20: #{wrapped_model_forward.1} parent=1 // pred_region
      %63 = dma.done [#allocation3], 256
    $region21: #{wrapped_model_forward.1} parent=1 // pred_fallthru
      _
    // Predicated region
    $region22: #{wrapped_model_forward.1} parent=1 // pred_check
      _
    $region23: #{wrapped_model_forward.1} parent=1 // pred_check_branch
      %65 = sbr.rel (0) target = $region25
    $region24: #{wrapped_model_forward.1} parent=1 // pred_region
      %66 = dma.done [#allocation6], 256
    $region25: #{wrapped_model_forward.1} parent=1 // pred_fallthru
      _
    // Predicated region
    $region26: #{wrapped_model_forward.1} parent=1 // pred_check
      _
    $region27: #{wrapped_model_forward.1} parent=1 // pred_check_branch
      %68 = sbr.rel (0) target = $region29
    $region28: #{wrapped_model_forward.1} parent=1 // pred_region
      %69 = dma.done [#allocation6], 256
    $region29: #{wrapped_model_forward.1} parent=1 // pred_fallthru
      _
    // Predicated region
    $region30: #{wrapped_model_forward.1} parent=1 // pred_check
      _
    $region31: #{wrapped_model_forward.1} parent=1 // pred_check_branch
      %71 = sbr.rel (0) target = $region33
    $region32: #{wrapped_model_forward.1} parent=1 // pred_region
      %72 = dma.done [#allocation9], 6144
    $region33: #{wrapped_model_forward.1} parent=1 // pred_fallthru
      _
    %v73 = vld [vmem:[#allocation2] sm:$0xff]
    %v74 = vld [vmem:[#allocation2 + $0x8] sm:$0xff]
    %v75 = vld [vmem:[#allocation5] sm:$0xff]
    %v76 = vld [vmem:[#allocation5 + $0x8] sm:$0xff]
    %v77 = vld [vmem:[#allocation7] sm:$0xff]
    %v78 = vld [vmem:[#allocation7 + $0x8] sm:$0xff]
    %v79 = vld [vmem:[#allocation8] sm:$0xff]
    %v80 = vld [vmem:[#allocation8 + $0x8] sm:$0xff]
    %v81 = vld [vmem:[#allocation8 + $0x10] sm:$0xff]
    %v82 = vld [vmem:[#allocation8 + $0x18] sm:$0xff]
    %v83 = vld [vmem:[#allocation8 + $0x20] sm:$0xff]
    %v84 = vld [vmem:[#allocation8 + $0x28] sm:$0xff]
    %v85 = vld [vmem:[#allocation8 + $0x30] sm:$0xff]
    %v86 = vld [vmem:[#allocation8 + $0x38] sm:$0xff]
    %vm87 = vcmask 261120
    %v89 = vsel %vm87, %v73, 0
    %v92 = vsel %vm87, %v74, 0
    %94 = vmatprep.subr.mxu0 %v80
    %95 = vmatpush1.msra.mxu0 %v79
    %96 = vmatprep.subr.mxu0 %v82
    %97 = vmatpush1.msra.mxu0 %v81
    %98 = vmatprep.subr.mxu0 %v84
    %99 = vmatpush1.msra.mxu0 %v83
    %100 = vmatprep.subr.mxu0 %v86
    %101 = vmatpush1.msra.mxu0 %v85
    %102 = vmatprep.subr.mxu0 0.0
    %103 = vmatpush1.msra.mxu0 0.0
    %104 = vmatprep.subr.mxu0 0.0
    %105 = vmatpush1.msra.mxu0 0.0
    %106 = vmatprep.subr.mxu0 0.0
    %107 = vmatpush1.msra.mxu0 0.0
    %108 = vmatprep.subr.mxu0 0.0
    %109 = vmatpush1.msra.mxu0 0.0
    %110 = vmatprep.subr.mxu0 0.0
    %111 = vmatpush1.msra.mxu0 0.0
    %112 = vmatprep.subr.mxu0 0.0
    %113 = vmatpush1.msra.mxu0 0.0
    %114 = vmatprep.subr.mxu0 0.0
    %115 = vmatpush1.msra.mxu0 0.0
    %116 = vmatprep.subr.mxu0 0.0
    %117 = vmatpush1.msra.mxu0 0.0
    %118 = vmatprep.subr.mxu0 0.0
    %119 = vmatpush1.msra.mxu0 0.0
    %120 = vmatprep.subr.mxu0 0.0
    %121 = vmatpush1.msra.mxu0 0.0
    %122 = vmatprep.subr.mxu0 0.0
    %123 = vmatpush1.msra.mxu0 0.0
    %124 = vmatprep.subr.mxu0 0.0
    %125 = vmatpush1.msra.mxu0 0.0
    %126 = vmatprep.subr.mxu0 0.0
    %127 = vmatpush1.msra.mxu0 0.0
    %128 = vmatprep.subr.mxu0 0.0
    %129 = vmatpush1.msra.mxu0 0.0
    %130 = vmatprep.subr.mxu0 0.0
    %131 = vmatpush1.msra.mxu0 0.0
    %132 = vmatprep.subr.mxu0 0.0
    %133 = vmatpush1.msra.mxu0 0.0
    %134 = vmatprep.subr.mxu0 0.0
    %135 = vmatpush1.msra.mxu0 0.0
    %136 = vmatprep.subr.mxu0 0.0
    %137 = vmatpush1.msra.mxu0 0.0
    %138 = vmatprep.subr.mxu0 0.0
    %139 = vmatpush1.msra.mxu0 0.0
    %140 = vmatprep.subr.mxu0 0.0
    %141 = vmatpush1.msra.mxu0 0.0
    %142 = vmatprep.subr.mxu0 0.0
    %143 = vmatpush1.msra.mxu0 0.0
    %144 = vmatprep.subr.mxu0 0.0
    %145 = vmatpush1.msra.mxu0 0.0
    %146 = vmatprep.subr.mxu0 0.0
    %147 = vmatpush1.msra.mxu0 0.0
    %148 = vmatprep.subr.mxu0 0.0
    %149 = vmatpush1.msra.mxu0 0.0
    %150 = vmatprep.subr.mxu0 0.0
    %151 = vmatpush1.msra.mxu0 0.0
    %152 = vmatprep.subr.mxu0 0.0
    %153 = vmatpush1.msra.mxu0 0.0
    %154 = vmatprep.subr.mxu0 0.0
    %155 = vmatpush1.msra.mxu0 0.0
    %156 = vmatprep.subr.mxu0 0.0
    %157 = vmatpush1.msra.mxu0 0.0
    %158 = vmatprep.mubr.f32.mxu0 0.0
    %159 = vmatmul.mubr.f32.gmra.mrb[0].mxu0 %v89
    %v160 = vpop.f32.mrb[0].mxu0
    %v161 = vadd.f32 0.0, %v160
    %v162 = vpop.f32.mrb[0].mxu0
    %v163 = vadd.f32 0.0, %v162
    %164 = vmatprep.mubr.f32.mxu0 0.0
    %165 = vmatmul.mubr.f32.gmra.mrb[0].mxu0 %v92
    %v166 = vpop.f32.mrb[0].mxu0
    %v167 = vadd.f32 0.0, %v166
    %v168 = vpop.f32.mrb[0].mxu0
    %v169 = vadd.f32 0.0, %v168
    %170 = vdwg.mxu0
    %v171 = vld [vmem:[#allocation8 + $0x40] sm:$0xff]
    %v172 = vld [vmem:[#allocation8 + $0x48] sm:$0xff]
    %v173 = vld [vmem:[#allocation8 + $0x50] sm:$0xff]
    %v174 = vld [vmem:[#allocation8 + $0x58] sm:$0xff]
    %vm175 = vcmask 130048
    %v177 = vsel %vm175, %v75, 0
    %v180 = vsel %vm175, %v76, 0
    %182 = vmatprep.subr.mxu0 %v172
    %183 = vmatpush1.msra.mxu0 %v171
    %184 = vmatprep.subr.mxu0 %v174
    %185 = vmatpush1.msra.mxu0 %v173
    %186 = vmatprep.subr.mxu0 0.0
    %187 = vmatpush1.msra.mxu0 0.0
    %188 = vmatprep.subr.mxu0 0.0
    %189 = vmatpush1.msra.mxu0 0.0
    %190 = vmatprep.subr.mxu0 0.0
    %191 = vmatpush1.msra.mxu0 0.0
    %192 = vmatprep.subr.mxu0 0.0
    %193 = vmatpush1.msra.mxu0 0.0
    %194 = vmatprep.subr.mxu0 0.0
    %195 = vmatpush1.msra.mxu0 0.0
    %196 = vmatprep.subr.mxu0 0.0
    %197 = vmatpush1.msra.mxu0 0.0
    %198 = vmatprep.subr.mxu0 0.0
    %199 = vmatpush1.msra.mxu0 0.0
    %200 = vmatprep.subr.mxu0 0.0
    %201 = vmatpush1.msra.mxu0 0.0
    %202 = vmatprep.subr.mxu0 0.0
    %203 = vmatpush1.msra.mxu0 0.0
    %204 = vmatprep.subr.mxu0 0.0
    %205 = vmatpush1.msra.mxu0 0.0
    %206 = vmatprep.subr.mxu0 0.0
    %207 = vmatpush1.msra.mxu0 0.0
    %208 = vmatprep.subr.mxu0 0.0
    %209 = vmatpush1.msra.mxu0 0.0
    %210 = vmatprep.subr.mxu0 0.0
    %211 = vmatpush1.msra.mxu0 0.0
    %212 = vmatprep.subr.mxu0 0.0
    %213 = vmatpush1.msra.mxu0 0.0
    %214 = vmatprep.subr.mxu0 0.0
    %215 = vmatpush1.msra.mxu0 0.0
    %216 = vmatprep.subr.mxu0 0.0
    %217 = vmatpush1.msra.mxu0 0.0
    %218 = vmatprep.subr.mxu0 0.0
    %219 = vmatpush1.msra.mxu0 0.0
    %220 = vmatprep.subr.mxu0 0.0
    %221 = vmatpush1.msra.mxu0 0.0
    %222 = vmatprep.subr.mxu0 0.0
    %223 = vmatpush1.msra.mxu0 0.0
    %224 = vmatprep.subr.mxu0 0.0
    %225 = vmatpush1.msra.mxu0 0.0
    %226 = vmatprep.subr.mxu0 0.0
    %227 = vmatpush1.msra.mxu0 0.0
    %228 = vmatprep.subr.mxu0 0.0
    %229 = vmatpush1.msra.mxu0 0.0
    %230 = vmatprep.subr.mxu0 0.0
    %231 = vmatpush1.msra.mxu0 0.0
    %232 = vmatprep.subr.mxu0 0.0
    %233 = vmatpush1.msra.mxu0 0.0
    %234 = vmatprep.subr.mxu0 0.0
    %235 = vmatpush1.msra.mxu0 0.0
    %236 = vmatprep.subr.mxu0 0.0
    %237 = vmatpush1.msra.mxu0 0.0
    %238 = vmatprep.subr.mxu0 0.0
    %239 = vmatpush1.msra.mxu0 0.0
    %240 = vmatprep.subr.mxu0 0.0
    %241 = vmatpush1.msra.mxu0 0.0
    %242 = vmatprep.subr.mxu0 0.0
    %243 = vmatpush1.msra.mxu0 0.0
    %244 = vmatprep.subr.mxu0 0.0
    %245 = vmatpush1.msra.mxu0 0.0
    %246 = vmatprep.mubr.f32.mxu0 0.0
    %247 = vmatmul.mubr.f32.gmra.mrb[0].mxu0 %v177
    %v248 = vpop.f32.mrb[0].mxu0
    %v249 = vadd.f32 0.0, %v248
    %v250 = vpop.f32.mrb[0].mxu0
    %v251 = vadd.f32 0.0, %v250
    %252 = vmatprep.mubr.f32.mxu0 0.0
    %253 = vmatmul.mubr.f32.gmra.mrb[0].mxu0 %v180
    %v254 = vpop.f32.mrb[0].mxu0
    %v255 = vadd.f32 0.0, %v254
    %v256 = vpop.f32.mrb[0].mxu0
    %v257 = vadd.f32 0.0, %v256
    %258 = vdwg.mxu0
    %v259 = vld [vmem:[#allocation8 + $0x60] sm:$0xff]
    %v260 = vld [vmem:[#allocation8 + $0x68] sm:$0xff]
    %v261 = vld [vmem:[#allocation8 + $0x70] sm:$0xff]
    %v262 = vld [vmem:[#allocation8 + $0x78] sm:$0xff]
    %v264 = vsel %vm175, %v77, 0
    %v267 = vsel %vm175, %v78, 0
    %269 = vmatprep.subr.mxu0 %v260
    %270 = vmatpush1.msra.mxu0 %v259
    %271 = vmatprep.subr.mxu0 %v262
    %272 = vmatpush1.msra.mxu0 %v261
    %273 = vmatprep.subr.mxu0 0.0
    %274 = vmatpush1.msra.mxu0 0.0
    %275 = vmatprep.subr.mxu0 0.0
    %276 = vmatpush1.msra.mxu0 0.0
    %277 = vmatprep.subr.mxu0 0.0
    %278 = vmatpush1.msra.mxu0 0.0
    %279 = vmatprep.subr.mxu0 0.0
    %280 = vmatpush1.msra.mxu0 0.0
    %281 = vmatprep.subr.mxu0 0.0
    %282 = vmatpush1.msra.mxu0 0.0
    %283 = vmatprep.subr.mxu0 0.0
    %284 = vmatpush1.msra.mxu0 0.0
    %285 = vmatprep.subr.mxu0 0.0
    %286 = vmatpush1.msra.mxu0 0.0
    %287 = vmatprep.subr.mxu0 0.0
    %288 = vmatpush1.msra.mxu0 0.0
    %289 = vmatprep.subr.mxu0 0.0
    %290 = vmatpush1.msra.mxu0 0.0
    %291 = vmatprep.subr.mxu0 0.0
    %292 = vmatpush1.msra.mxu0 0.0
    %293 = vmatprep.subr.mxu0 0.0
    %294 = vmatpush1.msra.mxu0 0.0
    %295 = vmatprep.subr.mxu0 0.0
    %296 = vmatpush1.msra.mxu0 0.0
    %297 = vmatprep.subr.mxu0 0.0
    %298 = vmatpush1.msra.mxu0 0.0
    %299 = vmatprep.subr.mxu0 0.0
    %300 = vmatpush1.msra.mxu0 0.0
    %301 = vmatprep.subr.mxu0 0.0
    %302 = vmatpush1.msra.mxu0 0.0
    %303 = vmatprep.subr.mxu0 0.0
    %304 = vmatpush1.msra.mxu0 0.0
    %305 = vmatprep.subr.mxu0 0.0
    %306 = vmatpush1.msra.mxu0 0.0
    %307 = vmatprep.subr.mxu0 0.0
    %308 = vmatpush1.msra.mxu0 0.0
    %309 = vmatprep.subr.mxu0 0.0
    %310 = vmatpush1.msra.mxu0 0.0
    %311 = vmatprep.subr.mxu0 0.0
    %312 = vmatpush1.msra.mxu0 0.0
    %313 = vmatprep.subr.mxu0 0.0
    %314 = vmatpush1.msra.mxu0 0.0
    %315 = vmatprep.subr.mxu0 0.0
    %316 = vmatpush1.msra.mxu0 0.0
    %317 = vmatprep.subr.mxu0 0.0
    %318 = vmatpush1.msra.mxu0 0.0
    %319 = vmatprep.subr.mxu0 0.0
    %320 = vmatpush1.msra.mxu0 0.0
    %321 = vmatprep.subr.mxu0 0.0
    %322 = vmatpush1.msra.mxu0 0.0
    %323 = vmatprep.subr.mxu0 0.0
    %324 = vmatpush1.msra.mxu0 0.0
    %325 = vmatprep.subr.mxu0 0.0
    %326 = vmatpush1.msra.mxu0 0.0
    %327 = vmatprep.subr.mxu0 0.0
    %328 = vmatpush1.msra.mxu0 0.0
    %329 = vmatprep.subr.mxu0 0.0
    %330 = vmatpush1.msra.mxu0 0.0
    %331 = vmatprep.subr.mxu0 0.0
    %332 = vmatpush1.msra.mxu0 0.0
    %333 = vmatprep.mubr.f32.mxu0 0.0
    %334 = vmatmul.mubr.f32.gmra.mrb[0].mxu0 %v264
    %v335 = vpop.f32.mrb[0].mxu0
    %v336 = vadd.f32 0.0, %v335
    %v337 = vpop.f32.mrb[0].mxu0
    %v338 = vadd.f32 0.0, %v337
    %339 = vmatprep.mubr.f32.mxu0 0.0
    %340 = vmatmul.mubr.f32.gmra.mrb[0].mxu0 %v267
    %v341 = vpop.f32.mrb[0].mxu0
    %v342 = vadd.f32 0.0, %v341
    %v343 = vpop.f32.mrb[0].mxu0
    %v344 = vadd.f32 0.0, %v343
    %345 = vdwg.mxu0
    %346 = vmatprep.subr.mxu0 0.0
    %347 = vmatpush1.xpose.msra.mxu0 %v249
    %348 = vmatprep.subr.mxu0 0.0
    %349 = vmatpush1.xpose.msra.mxu0 %v336
    %350 = vmatprep.subr.mxu0 0.0
    %351 = vmatpush1.xpose.msra.mxu0 0.0
    %352 = vmatprep.subr.mxu0 0.0
    %353 = vmatpush1.xpose.msra.mxu0 0.0
    %354 = vmatprep.subr.mxu0 0.0
    %355 = vmatpush1.xpose.msra.mxu0 0.0
    %356 = vmatprep.subr.mxu0 0.0
    %357 = vmatpush1.xpose.msra.mxu0 0.0
    %358 = vmatprep.subr.mxu0 0.0
    %359 = vmatpush1.xpose.msra.mxu0 0.0
    %360 = vmatprep.subr.mxu0 0.0
    %361 = vmatpush1.xpose.msra.mxu0 0.0
    %362 = vmatprep.subr.mxu0 0.0
    %363 = vmatpush1.xpose.msra.mxu0 0.0
    %364 = vmatprep.subr.mxu0 0.0
    %365 = vmatpush1.xpose.msra.mxu0 0.0
    %366 = vmatprep.subr.mxu0 0.0
    %367 = vmatpush1.xpose.msra.mxu0 0.0
    %368 = vmatprep.subr.mxu0 0.0
    %369 = vmatpush1.xpose.msra.mxu0 0.0
    %370 = vmatprep.subr.mxu0 0.0
    %371 = vmatpush1.xpose.msra.mxu0 0.0
    %372 = vmatprep.subr.mxu0 0.0
    %373 = vmatpush1.xpose.msra.mxu0 0.0
    %374 = vmatprep.subr.mxu0 0.0
    %375 = vmatpush1.xpose.msra.mxu0 0.0
    %376 = vmatprep.subr.mxu0 0.0
    %377 = vmatpush1.xpose.msra.mxu0 0.0
    %378 = vmatprep.subr.mxu0 0.0
    %379 = vmatpush1.xpose.msra.mxu0 0.0
    %380 = vmatprep.subr.mxu0 0.0
    %381 = vmatpush1.xpose.msra.mxu0 0.0
    %382 = vmatprep.subr.mxu0 0.0
    %383 = vmatpush1.xpose.msra.mxu0 0.0
    %384 = vmatprep.subr.mxu0 0.0
    %385 = vmatpush1.xpose.msra.mxu0 0.0
    %386 = vmatprep.subr.mxu0 0.0
    %387 = vmatpush1.xpose.msra.mxu0 0.0
    %388 = vmatprep.subr.mxu0 0.0
    %389 = vmatpush1.xpose.msra.mxu0 0.0
    %390 = vmatprep.subr.mxu0 0.0
    %391 = vmatpush1.xpose.msra.mxu0 0.0
    %392 = vmatprep.subr.mxu0 0.0
    %393 = vmatpush1.xpose.msra.mxu0 0.0
    %394 = vmatprep.subr.mxu0 0.0
    %395 = vmatpush1.xpose.msra.mxu0 0.0
    %396 = vmatprep.subr.mxu0 0.0
    %397 = vmatpush1.xpose.msra.mxu0 0.0
    %398 = vmatprep.subr.mxu0 0.0
    %399 = vmatpush1.xpose.msra.mxu0 0.0
    %400 = vmatprep.subr.mxu0 0.0
    %401 = vmatpush1.xpose.msra.mxu0 0.0
    %402 = vmatprep.subr.mxu0 0.0
    %403 = vmatpush1.xpose.msra.mxu0 0.0
    %404 = vmatprep.subr.mxu0 0.0
    %405 = vmatpush1.xpose.msra.mxu0 0.0
    %406 = vmatprep.subr.mxu0 0.0
    %407 = vmatpush1.xpose.msra.mxu0 0.0
    %408 = vmatprep.subr.mxu0 0.0
    %409 = vmatpush1.xpose.msra.mxu0 0.0
    %410 = vmatprep.mubr.f32.mxu0 0.0
    %411 = vmatmul.mubr.f32.gmra.mrb[0].mxu0 %v163
    %v412 = vpop.f32.mrb[0].mxu0
    %v413 = vadd.f32 0.0, %v412
    %v414 = vpop.f32.mrb[0].mxu0
    %415 = vdwg.mxu0
    %416 = vmatprep.subr.mxu0 0.0
    %417 = vmatpush1.xpose.msra.mxu0 %v255
    %418 = vmatprep.subr.mxu0 0.0
    %419 = vmatpush1.xpose.msra.mxu0 %v342
    %420 = vmatprep.subr.mxu0 0.0
    %421 = vmatpush1.xpose.msra.mxu0 0.0
    %422 = vmatprep.subr.mxu0 0.0
    %423 = vmatpush1.xpose.msra.mxu0 0.0
    %424 = vmatprep.subr.mxu0 0.0
    %425 = vmatpush1.xpose.msra.mxu0 0.0
    %426 = vmatprep.subr.mxu0 0.0
    %427 = vmatpush1.xpose.msra.mxu0 0.0
    %428 = vmatprep.subr.mxu0 0.0
    %429 = vmatpush1.xpose.msra.mxu0 0.0
    %430 = vmatprep.subr.mxu0 0.0
    %431 = vmatpush1.xpose.msra.mxu0 0.0
    %432 = vmatprep.subr.mxu0 0.0
    %433 = vmatpush1.xpose.msra.mxu0 0.0
    %434 = vmatprep.subr.mxu0 0.0
    %435 = vmatpush1.xpose.msra.mxu0 0.0
    %436 = vmatprep.subr.mxu0 0.0
    %437 = vmatpush1.xpose.msra.mxu0 0.0
    %438 = vmatprep.subr.mxu0 0.0
    %439 = vmatpush1.xpose.msra.mxu0 0.0
    %440 = vmatprep.subr.mxu0 0.0
    %441 = vmatpush1.xpose.msra.mxu0 0.0
    %442 = vmatprep.subr.mxu0 0.0
    %443 = vmatpush1.xpose.msra.mxu0 0.0
    %444 = vmatprep.subr.mxu0 0.0
    %445 = vmatpush1.xpose.msra.mxu0 0.0
    %446 = vmatprep.subr.mxu0 0.0
    %447 = vmatpush1.xpose.msra.mxu0 0.0
    %448 = vmatprep.subr.mxu0 0.0
    %449 = vmatpush1.xpose.msra.mxu0 0.0
    %450 = vmatprep.subr.mxu0 0.0
    %451 = vmatpush1.xpose.msra.mxu0 0.0
    %452 = vmatprep.subr.mxu0 0.0
    %453 = vmatpush1.xpose.msra.mxu0 0.0
    %454 = vmatprep.subr.mxu0 0.0
    %455 = vmatpush1.xpose.msra.mxu0 0.0
    %456 = vmatprep.subr.mxu0 0.0
    %457 = vmatpush1.xpose.msra.mxu0 0.0
    %458 = vmatprep.subr.mxu0 0.0
    %459 = vmatpush1.xpose.msra.mxu0 0.0
    %460 = vmatprep.subr.mxu0 0.0
    %461 = vmatpush1.xpose.msra.mxu0 0.0
    %462 = vmatprep.subr.mxu0 0.0
    %463 = vmatpush1.xpose.msra.mxu0 0.0
    %464 = vmatprep.subr.mxu0 0.0
    %465 = vmatpush1.xpose.msra.mxu0 0.0
    %466 = vmatprep.subr.mxu0 0.0
    %467 = vmatpush1.xpose.msra.mxu0 0.0
    %468 = vmatprep.subr.mxu0 0.0
    %469 = vmatpush1.xpose.msra.mxu0 0.0
    %470 = vmatprep.subr.mxu0 0.0
    %471 = vmatpush1.xpose.msra.mxu0 0.0
    %472 = vmatprep.subr.mxu0 0.0
    %473 = vmatpush1.xpose.msra.mxu0 0.0
    %474 = vmatprep.subr.mxu0 0.0
    %475 = vmatpush1.xpose.msra.mxu0 0.0
    %476 = vmatprep.subr.mxu0 0.0
    %477 = vmatpush1.xpose.msra.mxu0 0.0
    %478 = vmatprep.subr.mxu0 0.0
    %479 = vmatpush1.xpose.msra.mxu0 0.0
    %480 = vmatprep.mubr.f32.mxu0 0.0
    %481 = vmatmul.mubr.f32.gmra.mrb[0].mxu0 %v169
    %v482 = vpop.f32.mrb[0].mxu0
    %v483 = vadd.f32 0.0, %v482
    %v484 = vpop.f32.mrb[0].mxu0
    %485 = vdwg.mxu0
    %v486 = vlaneseq
    %v487 = vand.u32 %v486, 127
    %vm488 = vcmp.ge.s32.totalorder %v487, 8
    %v489 = vsel %vm488, 1, 0
    %vm490 = vcmp.eq.s32.totalorder %v489, 1
    %v491 = vsel %vm490, -1e+30, %v413
    %v492 = vsel %vm490, -1e+30, %v483
    %v493 = vsel %vm175, %v491, -inf
    %494 = vmax.xlane.f32.xlu0 %v493
    %v495 = vpop.xlane.xlu0 %494
    %v496 = vsel %vm175, %v492, -inf
    %497 = vmax.xlane.f32.xlu0 %v496
    %v498 = vpop.xlane.xlu0 %497
    %v499 = vsel %vm490, %v413, -1e+30
    %v500 = vsel %vm490, %v483, -1e+30
    %v501 = vsel %vm175, %v499, -inf
    %502 = vmax.xlane.f32.xlu0 %v501
    %v503 = vpop.xlane.xlu0 %502
    %v504 = vsel %vm175, %v500, -inf
    %505 = vmax.xlane.f32.xlu0 %v504
    %v506 = vpop.xlane.xlu0 %505
    %v507 = vsel %vm490, %v503, %v495
    %v508 = vsel %vm490, %v506, %v498
    %v509 = vsub.f32 %v413, %v507
    %v510 = vsub.f32 %v483, %v508
    %v511 = vmul.f32 %v509, 1.442695
    %v512 = vpow.pop %v511
    %v513 = vmul.f32 %v510, 1.442695
    %v514 = vpow.pop %v513
    %v515 = vsel %vm490, 0.0, %v512
    %v516 = vsel %vm490, 0.0, %v514
    %v517 = vsel %vm175, %v515, 0.0
    %518 = vadd.xlane.f32.xlu0 %v517
    %v519 = vpop.xlane.xlu0 %518
    %v520 = vsel %vm175, %v516, 0.0
    %521 = vadd.xlane.f32.xlu0 %v520
    %v522 = vpop.xlane.xlu0 %521
    %v523 = vsel %vm490, %v512, 0.0
    %v524 = vsel %vm490, %v514, 0.0
    %v525 = vsel %vm175, %v523, 0.0
    %526 = vadd.xlane.f32.xlu0 %v525
    %v527 = vpop.xlane.xlu0 %526
    %v528 = vsel %vm175, %v524, 0.0
    %529 = vadd.xlane.f32.xlu0 %v528
    %v530 = vpop.xlane.xlu0 %529
    %v531 = vsel %vm490, %v527, %v519
    %v532 = vsel %vm490, %v530, %v522
    %v533 = vrcp.pop %v531
    %v534 = vmul.f32 %v512, %v533
    %v535 = vrcp.pop %v532
    %v536 = vmul.f32 %v514, %v535
    %v538 = vsel %vm175, %v534, 0
    %540 = vmatprep.subr.mxu0 0.0
    %541 = vmatpush1.msra.mxu0 %v251
    %542 = vmatprep.subr.mxu0 0.0
    %543 = vmatpush1.msra.mxu0 %v338
    %544 = vmatprep.subr.mxu0 0.0
    %545 = vmatpush1.msra.mxu0 0.0
    %546 = vmatprep.subr.mxu0 0.0
    %547 = vmatpush1.msra.mxu0 0.0
    %548 = vmatprep.subr.mxu0 0.0
    %549 = vmatpush1.msra.mxu0 0.0
    %550 = vmatprep.subr.mxu0 0.0
    %551 = vmatpush1.msra.mxu0 0.0
    %552 = vmatprep.subr.mxu0 0.0
    %553 = vmatpush1.msra.mxu0 0.0
    %554 = vmatprep.subr.mxu0 0.0
    %555 = vmatpush1.msra.mxu0 0.0
    %556 = vmatprep.subr.mxu0 0.0
    %557 = vmatpush1.msra.mxu0 0.0
    %558 = vmatprep.subr.mxu0 0.0
    %559 = vmatpush1.msra.mxu0 0.0
    %560 = vmatprep.subr.mxu0 0.0
    %561 = vmatpush1.msra.mxu0 0.0
    %562 = vmatprep.subr.mxu0 0.0
    %563 = vmatpush1.msra.mxu0 0.0
    %564 = vmatprep.subr.mxu0 0.0
    %565 = vmatpush1.msra.mxu0 0.0
    %566 = vmatprep.subr.mxu0 0.0
    %567 = vmatpush1.msra.mxu0 0.0
    %568 = vmatprep.subr.mxu0 0.0
    %569 = vmatpush1.msra.mxu0 0.0
    %570 = vmatprep.subr.mxu0 0.0
    %571 = vmatpush1.msra.mxu0 0.0
    %572 = vmatprep.subr.mxu0 0.0
    %573 = vmatpush1.msra.mxu0 0.0
    %574 = vmatprep.subr.mxu0 0.0
    %575 = vmatpush1.msra.mxu0 0.0
    %576 = vmatprep.subr.mxu0 0.0
    %577 = vmatpush1.msra.mxu0 0.0
    %578 = vmatprep.subr.mxu0 0.0
    %579 = vmatpush1.msra.mxu0 0.0
    %580 = vmatprep.subr.mxu0 0.0
    %581 = vmatpush1.msra.mxu0 0.0
    %582 = vmatprep.subr.mxu0 0.0
    %583 = vmatpush1.msra.mxu0 0.0
    %584 = vmatprep.subr.mxu0 0.0
    %585 = vmatpush1.msra.mxu0 0.0
    %586 = vmatprep.subr.mxu0 0.0
    %587 = vmatpush1.msra.mxu0 0.0
    %588 = vmatprep.subr.mxu0 0.0
    %589 = vmatpush1.msra.mxu0 0.0
    %590 = vmatprep.subr.mxu0 0.0
    %591 = vmatpush1.msra.mxu0 0.0
    %592 = vmatprep.subr.mxu0 0.0
    %593 = vmatpush1.msra.mxu0 0.0
    %594 = vmatprep.subr.mxu0 0.0
    %595 = vmatpush1.msra.mxu0 0.0
    %596 = vmatprep.subr.mxu0 0.0
    %597 = vmatpush1.msra.mxu0 0.0
    %598 = vmatprep.subr.mxu0 0.0
    %599 = vmatpush1.msra.mxu0 0.0
    %600 = vmatprep.subr.mxu0 0.0
    %601 = vmatpush1.msra.mxu0 0.0
    %602 = vmatprep.subr.mxu0 0.0
    %603 = vmatpush1.msra.mxu0 0.0
    %604 = vmatprep.mubr.f32.mxu0 0.0
    %605 = vmatmul.mubr.f32.gmra.mrb[0].mxu0 %v538
    %v606 = vpop.f32.mrb[0].mxu0
    %v607 = vadd.f32 0.0, %v606
    %v608 = vpop.f32.mrb[0].mxu0
    %609 = vdwg.mxu0
    %v611 = vsel %vm175, %v536, 0
    %613 = vmatprep.subr.mxu0 0.0
    %614 = vmatpush1.msra.mxu0 %v257
    %615 = vmatprep.subr.mxu0 0.0
    %616 = vmatpush1.msra.mxu0 %v344
    %617 = vmatprep.subr.mxu0 0.0
    %618 = vmatpush1.msra.mxu0 0.0
    %619 = vmatprep.subr.mxu0 0.0
    %620 = vmatpush1.msra.mxu0 0.0
    %621 = vmatprep.subr.mxu0 0.0
    %622 = vmatpush1.msra.mxu0 0.0
    %623 = vmatprep.subr.mxu0 0.0
    %624 = vmatpush1.msra.mxu0 0.0
    %625 = vmatprep.subr.mxu0 0.0
    %626 = vmatpush1.msra.mxu0 0.0
    %627 = vmatprep.subr.mxu0 0.0
    %628 = vmatpush1.msra.mxu0 0.0
    %629 = vmatprep.subr.mxu0 0.0
    %630 = vmatpush1.msra.mxu0 0.0
    %631 = vmatprep.subr.mxu0 0.0
    %632 = vmatpush1.msra.mxu0 0.0
    %633 = vmatprep.subr.mxu0 0.0
    %634 = vmatpush1.msra.mxu0 0.0
    %635 = vmatprep.subr.mxu0 0.0
    %636 = vmatpush1.msra.mxu0 0.0
    %637 = vmatprep.subr.mxu0 0.0
    %638 = vmatpush1.msra.mxu0 0.0
    %639 = vmatprep.subr.mxu0 0.0
    %640 = vmatpush1.msra.mxu0 0.0
    %641 = vmatprep.subr.mxu0 0.0
    %642 = vmatpush1.msra.mxu0 0.0
    %643 = vmatprep.subr.mxu0 0.0
    %644 = vmatpush1.msra.mxu0 0.0
    %645 = vmatprep.subr.mxu0 0.0
    %646 = vmatpush1.msra.mxu0 0.0
    %647 = vmatprep.subr.mxu0 0.0
    %648 = vmatpush1.msra.mxu0 0.0
    %649 = vmatprep.subr.mxu0 0.0
    %650 = vmatpush1.msra.mxu0 0.0
    %651 = vmatprep.subr.mxu0 0.0
    %652 = vmatpush1.msra.mxu0 0.0
    %653 = vmatprep.subr.mxu0 0.0
    %654 = vmatpush1.msra.mxu0 0.0
    %655 = vmatprep.subr.mxu0 0.0
    %656 = vmatpush1.msra.mxu0 0.0
    %657 = vmatprep.subr.mxu0 0.0
    %658 = vmatpush1.msra.mxu0 0.0
    %659 = vmatprep.subr.mxu0 0.0
    %660 = vmatpush1.msra.mxu0 0.0
    %661 = vmatprep.subr.mxu0 0.0
    %662 = vmatpush1.msra.mxu0 0.0
    %663 = vmatprep.subr.mxu0 0.0
    %664 = vmatpush1.msra.mxu0 0.0
    %665 = vmatprep.subr.mxu0 0.0
    %666 = vmatpush1.msra.mxu0 0.0
    %667 = vmatprep.subr.mxu0 0.0
    %668 = vmatpush1.msra.mxu0 0.0
    %669 = vmatprep.subr.mxu0 0.0
    %670 = vmatpush1.msra.mxu0 0.0
    %671 = vmatprep.subr.mxu0 0.0
    %672 = vmatpush1.msra.mxu0 0.0
    %673 = vmatprep.subr.mxu0 0.0
    %674 = vmatpush1.msra.mxu0 0.0
    %675 = vmatprep.subr.mxu0 0.0
    %676 = vmatpush1.msra.mxu0 0.0
    %677 = vmatprep.mubr.f32.mxu0 0.0
    %678 = vmatmul.mubr.f32.gmra.mrb[0].mxu0 %v611
    %v679 = vpop.f32.mrb[0].mxu0
    %v680 = vadd.f32 0.0, %v679
    %v681 = vpop.f32.mrb[0].mxu0
    %682 = vdwg.mxu0
    %v683 = vadd.f32 %v161, %v607
    %v684 = vadd.f32 %v167, %v680
    %v685 = vrot.slane %v683, 4
    %v686 = vadd.f32 %v683, %v685
    %v687 = vrot.slane %v686, 2
    %v688 = vadd.f32 %v686, %v687
    %v689 = vrot.slane %v688, 1
    %v690 = vadd.f32 %v688, %v689
    %v691 = vrot.slane %v684, 4
    %v692 = vadd.f32 %v684, %v691
    %v693 = vrot.slane %v692, 2
    %v694 = vadd.f32 %v692, %v693
    %v695 = vrot.slane %v694, 1
    %v696 = vadd.f32 %v694, %v695
    %v697 = vrcp.pop 8.0
    %v698 = vmul.f32 %v690, %v697
    %v699 = vmul.f32 %v696, %v697
    %vm700 = vcmp.eq.s32.totalorder %v487, 127
    %v701 = vsel %vm700, 1, 0
    %v702 = vcvt.s32.f32 %v701
    %v703 = vadd.f32 %v698, %v702
    %v704 = vadd.f32 %v699, %v702
    %v705 = vld [vmem:[#allocation8 + $0x80] sm:$0xff]
    %v706 = vld [vmem:[#allocation8 + $0x90] sm:$0xff]
    %v707 = vld [vmem:[#allocation8 + $0xa0] sm:$0xff]
    %v708 = vld [vmem:[#allocation8 + $0xb0] sm:$0xff]
    %v709 = vld [vmem:[#allocation8 + $0xc0] sm:$0xff]
    %v710 = vld [vmem:[#allocation8 + $0xd0] sm:$0xff]
    %v711 = vld [vmem:[#allocation8 + $0xe0] sm:$0xff]
    %v712 = vld [vmem:[#allocation8 + $0xf0] sm:$0xff]
    %v713 = vld [vmem:[#allocation8 + $0x100] sm:$0xff]
    %v714 = vld [vmem:[#allocation8 + $0x110] sm:$0xff]
    %v715 = vld [vmem:[#allocation8 + $0x120] sm:$0xff]
    %v716 = vld [vmem:[#allocation8 + $0x130] sm:$0xff]
    %v717 = vld [vmem:[#allocation8 + $0x140] sm:$0xff]
    %v718 = vld [vmem:[#allocation8 + $0x150] sm:$0xff]
    %v719 = vld [vmem:[#allocation8 + $0x160] sm:$0xff]
    %v720 = vld [vmem:[#allocation8 + $0x170] sm:$0xff]
    %v723 = vrot.slane %v704, 7
    %vm724 = vcmask 1041409
    %v725 = vsel %vm724, %v723, %v703
    %727 = vmatprep.subr.mxu0 0.0
    %728 = vmatpush1.msra.mxu0 %v705
    %729 = vmatprep.subr.mxu0 0.0
    %730 = vmatpush1.msra.mxu0 %v706
    %731 = vmatprep.subr.mxu0 0.0
    %732 = vmatpush1.msra.mxu0 %v707
    %733 = vmatprep.subr.mxu0 0.0
    %734 = vmatpush1.msra.mxu0 %v708
    %735 = vmatprep.subr.mxu0 0.0
    %736 = vmatpush1.msra.mxu0 %v709
    %737 = vmatprep.subr.mxu0 0.0
    %738 = vmatpush1.msra.mxu0 %v710
    %739 = vmatprep.subr.mxu0 0.0
    %740 = vmatpush1.msra.mxu0 %v711
    %741 = vmatprep.subr.mxu0 0.0
    %742 = vmatpush1.msra.mxu0 %v712
    %743 = vmatprep.subr.mxu0 0.0
    %744 = vmatpush1.msra.mxu0 %v713
    %745 = vmatprep.subr.mxu0 0.0
    %746 = vmatpush1.msra.mxu0 %v714
    %747 = vmatprep.subr.mxu0 0.0
    %748 = vmatpush1.msra.mxu0 %v715
    %749 = vmatprep.subr.mxu0 0.0
    %750 = vmatpush1.msra.mxu0 %v716
    %751 = vmatprep.subr.mxu0 0.0
    %752 = vmatpush1.msra.mxu0 %v717
    %753 = vmatprep.subr.mxu0 0.0
    %754 = vmatpush1.msra.mxu0 %v718
    %755 = vmatprep.subr.mxu0 0.0
    %756 = vmatpush1.msra.mxu0 %v719
    %757 = vmatprep.subr.mxu0 0.0
    %758 = vmatpush1.msra.mxu0 %v720
    %759 = vmatprep.subr.mxu0 0.0
    %760 = vmatpush1.msra.mxu0 0.0
    %761 = vmatprep.subr.mxu0 0.0
    %762 = vmatpush1.msra.mxu0 0.0
    %763 = vmatprep.subr.mxu0 0.0
    %764 = vmatpush1.msra.mxu0 0.0
    %765 = vmatprep.subr.mxu0 0.0
    %766 = vmatpush1.msra.mxu0 0.0
    %767 = vmatprep.subr.mxu0 0.0
    %768 = vmatpush1.msra.mxu0 0.0
    %769 = vmatprep.subr.mxu0 0.0
    %770 = vmatpush1.msra.mxu0 0.0
    %771 = vmatprep.subr.mxu0 0.0
    %772 = vmatpush1.msra.mxu0 0.0
    %773 = vmatprep.subr.mxu0 0.0
    %774 = vmatpush1.msra.mxu0 0.0
    %775 = vmatprep.subr.mxu0 0.0
    %776 = vmatpush1.msra.mxu0 0.0
    %777 = vmatprep.subr.mxu0 0.0
    %778 = vmatpush1.msra.mxu0 0.0
    %779 = vmatprep.subr.mxu0 0.0
    %780 = vmatpush1.msra.mxu0 0.0
    %781 = vmatprep.subr.mxu0 0.0
    %782 = vmatpush1.msra.mxu0 0.0
    %783 = vmatprep.subr.mxu0 0.0
    %784 = vmatpush1.msra.mxu0 0.0
    %785 = vmatprep.subr.mxu0 0.0
    %786 = vmatpush1.msra.mxu0 0.0
    %787 = vmatprep.subr.mxu0 0.0
    %788 = vmatpush1.msra.mxu0 0.0
    %789 = vmatprep.subr.mxu0 0.0
    %790 = vmatpush1.msra.mxu0 0.0
    %791 = vmatprep.mubr.f32.mxu0 0.0
    %792 = vmatmul.mubr.f32.gmra.mrb[0].mxu0 %v725
    %v793 = vpop.f32.mrb[0].mxu0
    %v794 = vadd.f32 0.0, %v793
    %v795 = vpop.f32.mrb[0].mxu0
    %796 = vdwg.mxu0
    %797 = vst [vmem:[#allocation10] sm:$0x3] %v794
    // Predicated region
    $region34: #{wrapped_model_forward.1} parent=1 // pred_check
      _
    $region35: #{wrapped_model_forward.1} parent=1 // pred_check_branch
      %799 = sbr.rel (0) target = $region37
    $region36: #{wrapped_model_forward.1} parent=1 // pred_region
      %s801 = ssub.s32 32, 32
      %802 = vsyncadd [#allocation4], %s801
      %s804 = sshll.u32 [#allocation10], 4
      %s805 = int_to_ptr.vmem [resolvable:$true] %s804
      %807 = dma.vmem_to_hbm [thread:$0]  %s805, 32, %s4, [#allocation4]
    $region37: #{wrapped_model_forward.1} parent=1 // pred_fallthru
      _
    // Predicated region
    $region38: #{wrapped_model_forward.1} parent=1 // pred_check
      _
    $region39: #{wrapped_model_forward.1} parent=1 // pred_check_branch
      %809 = sbr.rel (0) target = $region41
    $region40: #{wrapped_model_forward.1} parent=1 // pred_region
      %810 = dma.done [#allocation4], 32
    $region41: #{wrapped_model_forward.1} parent=1 // pred_fallthru
      _
    %811 = vsyncpa [#allocation3], 1
    %812 = vsyncpa [#allocation6], 1
    %813 = vsyncpa [#allocation9], 1
    %814 = vsyncpa [#allocation4], 1

</llo_original>
